<compile_context>
chip_gen: v5e
topology: v5e:2x2
jax: 0.10.0
libtpu: 0.0.40
codegen_flags: <defaults>
</compile_context>

<pallas_src>
import jax
import jax.numpy as jnp
from jax.experimental import pallas as pl
from jax.experimental.pallas import tpu as pltpu


def _round_up(x, m):
    return (x + m - 1) // m * m


# ---------------------------------------------------------------------------
# Pallas kernel: fused (sparse_w * mx) sublane-sum + (dense_x * dense_w)
# sublane-sum + bias, batch on lanes, lane-dense [1, TB] output.
# ---------------------------------------------------------------------------
def ifm_linear_kernel(sw_ref, mx_ref, dx_ref, dw_ref, bias_ref, out_ref):
    # sw_ref  : [S, TB] f32   gathered sparse embedding weights
    # mx_ref  : [S, TB]       sparse multipliers (input dtype, cast here)
    # dx_ref  : [D, TB]       dense feature values (input dtype, cast here)
    # dw_ref  : [D, 1]  f32   dense weights (lane-broadcast)
    # bias_ref: [1, 1]  f32
    # out_ref : [1, TB] f32
    sparse = sw_ref[...] * mx_ref[...].astype(jnp.float32)       # [S, TB]
    dense = dx_ref[...].astype(jnp.float32) * dw_ref[...]        # [D, TB]
    total = (jnp.sum(sparse, axis=0, keepdims=True)
             + jnp.sum(dense, axis=0, keepdims=True))            # [1, TB]
    out_ref[...] = total + bias_ref[...]


def ifm_linear_forward(sparse_idx, mx, dense_x, sparse_tables, dense_w, bias,
                       sparse_feats=None, dense_feats=None, tile_b=512):
    """
    sparse_idx    : dict  feat -> int32 [B]
    mx            : [B, S]  sparse multiplier matrix (any float dtype)
    dense_x       : dict  feat -> [B] dense feature values
    sparse_tables : dict  feat -> float32 [num_f, 1] embedding tables
    dense_w       : dict  feat -> float32 [1, 1]
    bias          : float32 [1]
    returns       : float32 [B]
    """
    # Explicit ordered feature lists (mx columns follow sparse_feats order).
    if sparse_feats is None:
        sparse_feats = list(sparse_idx.keys())
    if dense_feats is None:
        dense_feats = list(dense_x.keys())

    S = len(sparse_feats)
    D = len(dense_feats)
    B = mx.shape[0]

    # --- glue: ONE fused gather over a concatenated table -------------------
    # (In a real model, concatenate the parameter tables once at init time.)
    offsets, acc = [], 0
    for f in sparse_feats:
        offsets.append(acc)
        acc += int(sparse_tables[f].shape[0])
    table = jnp.concatenate([sparse_tables[f][:, 0] for f in sparse_feats],
                            axis=0)                                    # [T]
    gidx = jnp.stack(
        [sparse_idx[f].astype(jnp.int32) + off
         for f, off in zip(sparse_feats, offsets)], axis=0)            # [S, B]
    sw = jnp.take(table, gidx, axis=0).astype(jnp.float32)             # [S, B]

    mx_t = jnp.transpose(mx)                                           # [S, B]
    dx = jnp.stack([dense_x[f] for f in dense_feats], axis=0)          # [D, B]
    dw = jnp.concatenate([dense_w[f].reshape(1, 1) for f in dense_feats],
                         axis=0).astype(jnp.float32)                   # [D, 1]
    bias2d = jnp.reshape(bias, (1, 1)).astype(jnp.float32)             # [1, 1]

    # --- batch tiling: lane-multiple tiles, grid over batch -----------------
    LANE = 128
    if B <= tile_b:
        tb = _round_up(max(B, 1), LANE)
    else:
        tb = tile_b
    b_pad = _round_up(B, tb)
    pad = b_pad - B
    if pad:
        sw = jnp.pad(sw, ((0, 0), (0, pad)))
        mx_t = jnp.pad(mx_t, ((0, 0), (0, pad)))
        dx = jnp.pad(dx, ((0, 0), (0, pad)))
    n_tiles = b_pad // tb

    cost = pl.CostEstimate(
        flops=2 * b_pad * (S + D),
        transcendentals=0,
        bytes_accessed=4 * b_pad * (2 * S + D + 1),
    )

    out = pl.pallas_call(
        ifm_linear_kernel,
        out_shape=jax.ShapeDtypeStruct((1, b_pad), jnp.float32),
        grid_spec=pltpu.PrefetchScalarGridSpec(
            num_scalar_prefetch=0,
            grid=(n_tiles,),
            in_specs=[
                pl.BlockSpec((S, tb), lambda i: (0, i)),   # sw
                pl.BlockSpec((S, tb), lambda i: (0, i)),   # mx (transposed)
                pl.BlockSpec((D, tb), lambda i: (0, i)),   # dx
                pl.BlockSpec((D, 1), lambda i: (0, 0)),    # dw (replicated)
                pl.BlockSpec((1, 1), lambda i: (0, 0)),    # bias (replicated)
            ],
            out_specs=pl.BlockSpec((1, tb), lambda i: (0, i)),
        ),
        compiler_params=pltpu.CompilerParams(
            dimension_semantics=("parallel",)),
        cost_estimate=cost,
    )(sw, mx_t, dx, dw, bias2d)

    return out[0, :B]                                                  # [B]


# ---------------------------------------------------------------------------
# Pure-JAX reference (mirrors the PyTorch forward) for verification.
# ---------------------------------------------------------------------------
def ifm_linear_reference(sparse_idx, mx, dense_x, sparse_tables, dense_w, bias):
    sw = jnp.stack(
        [jnp.take(sparse_tables[f][:, 0], sparse_idx[f].astype(jnp.int32))
         for f in sparse_idx],
        axis=-1,
    )
    sparse_x = sw * mx
    dense_part = jnp.stack(
        [dense_x[f].astype(jnp.float32) * dense_w[f][0, 0] for f in dense_x],
        axis=-1,
    )
    out = jnp.concatenate([sparse_x, dense_part], axis=-1)
    out = jnp.sum(out, axis=1, keepdims=True) + bias
    return out[:, 0]


if __name__ == "__main__":
    key = jax.random.PRNGKey(0)

    # Module config (synthetic, deterministic init):
    sparse_feat_and_nums = [("s0", 10), ("s1", 7), ("s2", 13), ("s3", 5)]
    dense_feats = ["d0", "d1", "d2"]
    B = 8

    keys = jax.random.split(key, 16)
    ki = iter(keys)

    # Parameters (deterministic init, stands in for weight_init()).
    sparse_tables = {
        f: 0.05 * jax.random.normal(next(ki), (n, 1), dtype=jnp.float32)
        for f, n in sparse_feat_and_nums
    }
    dense_w = {
        f: 0.05 * jax.random.normal(next(ki), (1, 1), dtype=jnp.float32)
        for f in dense_feats
    }
    bias = jnp.zeros((1,), dtype=jnp.float32)

    # Inputs.
    sparse_idx = {
        f: jax.random.randint(next(ki), (B,), 0, n, dtype=jnp.int32)
        for f, n in sparse_feat_and_nums
    }
    mx = jax.random.normal(next(ki), (B, len(sparse_feat_and_nums)),
                           dtype=jnp.float32)
    dense_x = {
        f: jax.random.normal(next(ki), (B,), dtype=jnp.float32)
        for f in dense_feats
    }

    out = ifm_linear_forward(
        sparse_idx, mx, dense_x, sparse_tables, dense_w, bias,
        sparse_feats=[f for f, _ in sparse_feat_and_nums],
        dense_feats=dense_feats,
    )
    out = jax.block_until_ready(out)

    ref = ifm_linear_reference(sparse_idx, mx, dense_x,
                               sparse_tables, dense_w, bias)
    ref = jax.block_until_ready(ref)

    assert out.shape == (B,)
    assert jnp.allclose(out, ref, atol=1e-5, rtol=1e-5), (out, ref)
    print("KERNEL_OK")
</pallas_src>

<mosaic_0001>
module attributes {stable_mosaic.version = 11 : i64} {
  func.func @ifm_linear_kernel(%arg0: i32, %arg1: memref<4x128xf32, #tpu.memory_space<vmem>>, %arg2: memref<4x128xf32, #tpu.memory_space<vmem>>, %arg3: memref<3x128xf32, #tpu.memory_space<vmem>>, %arg4: memref<3x1xf32, #tpu.memory_space<vmem>>, %arg5: memref<1x1xf32, #tpu.memory_space<vmem>>, %arg6: memref<1x128xf32, #tpu.memory_space<vmem>>) attributes {dimension_semantics = [#tpu.dimension_semantics<parallel>], iteration_bounds = array<i64: 1>, scalar_prefetch = 0 : i64, scratch_operands = 0 : i64, tpu.core_type = #tpu.core_type<tc>, window_params = [{transform_indices = @transform_0, window_bounds = array<i64: 4, 128>}, {transform_indices = @transform_1, window_bounds = array<i64: 4, 128>}, {transform_indices = @transform_2, window_bounds = array<i64: 3, 128>}, {pipeline_mode = #tpu.pipeline_mode<synchronous>, transform_indices = @transform_3, window_bounds = array<i64: 3, 1>}, {pipeline_mode = #tpu.pipeline_mode<synchronous>, transform_indices = @transform_4, window_bounds = array<i64: 1, 1>}, {transform_indices = @transform_5, window_bounds = array<i64: 1, 128>}]} {
    %c0 = arith.constant 0 : index
    %c0_0 = arith.constant 0 : index
    %0 = vector.load %arg1[%c0, %c0_0] : memref<4x128xf32, #tpu.memory_space<vmem>>, vector<4x128xf32>
    %c0_1 = arith.constant 0 : index
    %c0_2 = arith.constant 0 : index
    %1 = vector.load %arg2[%c0_1, %c0_2] : memref<4x128xf32, #tpu.memory_space<vmem>>, vector<4x128xf32>
    %2 = arith.mulf %0, %1 : vector<4x128xf32>
    %c0_3 = arith.constant 0 : index
    %c0_4 = arith.constant 0 : index
    %3 = vector.load %arg3[%c0_3, %c0_4] : memref<3x128xf32, #tpu.memory_space<vmem>>, vector<3x128xf32>
    %c0_5 = arith.constant 0 : index
    %c0_6 = arith.constant 0 : index
    %4 = vector.load %arg4[%c0_5, %c0_6] : memref<3x1xf32, #tpu.memory_space<vmem>>, vector<3x1xf32>
    %5 = vector.broadcast %4 : vector<3x1xf32> to vector<3x128xf32>
    %6 = arith.mulf %3, %5 : vector<3x128xf32>
    %cst = arith.constant dense<0.000000e+00> : vector<128xf32>
    %7 = vector.multi_reduction <add>, %2, %cst [0] : vector<4x128xf32> to vector<128xf32>
    %8 = vector.shape_cast %7 : vector<128xf32> to vector<1x128xf32>
    %cst_7 = arith.constant dense<0.000000e+00> : vector<128xf32>
    %9 = vector.multi_reduction <add>, %6, %cst_7 [0] : vector<3x128xf32> to vector<128xf32>
    %10 = vector.shape_cast %9 : vector<128xf32> to vector<1x128xf32>
    %11 = arith.addf %8, %10 : vector<1x128xf32>
    %c0_8 = arith.constant 0 : index
    %c0_9 = arith.constant 0 : index
    %12 = vector.load %arg5[%c0_8, %c0_9] : memref<1x1xf32, #tpu.memory_space<vmem>>, vector<1x1xf32>
    %13 = vector.broadcast %12 : vector<1x1xf32> to vector<1x128xf32>
    %14 = arith.addf %11, %13 : vector<1x128xf32>
    %c0_10 = arith.constant 0 : index
    %c0_11 = arith.constant 0 : index
    %15 = vector.load %arg6[%c0_10, %c0_11] : memref<1x128xf32, #tpu.memory_space<vmem>>, vector<1x128xf32>
    tpu.vector_store %arg6[%c0_10, %c0_11], %14 {strides = array<i32>} : memref<1x128xf32, #tpu.memory_space<vmem>>, vector<1x128xf32>,
    return
  }
  func.func @transform_0(%arg0: i32) -> (i32, i32) {
    %c0_i32 = arith.constant 0 : i32
    %c0_i32_0 = arith.constant 0 : i32
    return %c0_i32, %arg0 : i32, i32
  }
  func.func @transform_1(%arg0: i32) -> (i32, i32) {
    %c0_i32 = arith.constant 0 : i32
    %c0_i32_0 = arith.constant 0 : i32
    return %c0_i32, %arg0 : i32, i32
  }
  func.func @transform_2(%arg0: i32) -> (i32, i32) {
    %c0_i32 = arith.constant 0 : i32
    %c0_i32_0 = arith.constant 0 : i32
    return %c0_i32, %arg0 : i32, i32
  }
  func.func @transform_3(%arg0: i32) -> (i32, i32) {
    %c0_i32 = arith.constant 0 : i32
    %c0_i32_0 = arith.constant 0 : i32
    %c0_i32_1 = arith.constant 0 : i32
    return %c0_i32, %c0_i32_0 : i32, i32
  }
  func.func @transform_4(%arg0: i32) -> (i32, i32) {
    %c0_i32 = arith.constant 0 : i32
    %c0_i32_0 = arith.constant 0 : i32
    %c0_i32_1 = arith.constant 0 : i32
    return %c0_i32, %c0_i32_0 : i32, i32
  }
  func.func @transform_5(%arg0: i32) -> (i32, i32) {
    %c0_i32 = arith.constant 0 : i32
    %c0_i32_0 = arith.constant 0 : i32
    return %c0_i32, %arg0 : i32, i32
  }
}

</mosaic_0001>

<llo_original>
// kernel: tpu_custom_call.1
$region0: #{tpu_custom_call.1}
  #allocation0 [shape = 'u32[]', space=smem, size = 0x4, offset = 0x4, fixed_abs, tag = 'smem constant byte address 0x4 - core index']
  #allocation1 [shape = 'u32[72,128]{1,0:T(1,128)}', space=vmem, size = 0x9000, scoped, tag = 'internal scratch']
  #allocation2 [shape = 'f32[1,1]{1,0:T(1,128)S(1)}', space=vmem, size = 0x200, scoped, tag = 'scoped memory for tpu_custom_call.1']
  %s0 = inlined_call_operand.vmem [shape: f32[4,128], index: 0, kind: input, shape index: {}]
  %s1 = inlined_call_operand.hbm [shape: f32[4,128], index: 1, kind: input, shape index: {}]
  %s2 = inlined_call_operand.vmem [shape: f32[3,128], index: 2, kind: input, shape index: {}]
  %s3 = inlined_call_operand.vmem [shape: f32[3,1], index: 3, kind: input, shape index: {}]
  %s4 = inlined_call_operand.<no memory space> [shape: f32[1,1], index: 4, kind: input, shape index: {}]
  %s5 = inlined_call_operand.hbm [shape: f32[1,128], index: 5, kind: output, shape index: {}]
  %s6 = sld [smem:[#allocation0]]
  $region34: #{tpu_custom_call.1} parent=0
    _
  %s8 = ssub.s32 1, %s6
  %s9 = scalar_select 0, %s8, %s6
  %v10 = vstv %s4
  %11 = vst [vmem:[#allocation2] sm:$0x1] %v10
  $region1: #{tpu_custom_call.1} parent=0
    #allocation3 [shape = 'u8[2048]{0}', space=vmem, size = 0x800, scoped, tag = 'input window, operand 1, single buffered']
    #allocation4 [shape = 's32[1]{0}', space=sflag, size = 0x4, scoped, tag = 'scoped memory for tpu_custom_call.1']
    #allocation5 [shape = 's32[1]{0}', space=sflag, size = 0x4, scoped, tag = 'scoped memory for tpu_custom_call.1']
    #allocation6 [shape = 'u8[512]{0}', space=vmem, size = 0x400, scoped, tag = 'output window, operand 0, single buffered']
    %12 = vsyncpa [#allocation4], 0
    %13 = vsyncpa [#allocation5], 0
    // Predicated region
    $region2: #{tpu_custom_call.1} parent=1 // pred_check
      _
    $region3: #{tpu_custom_call.1} parent=1 // pred_check_branch
      %15 = sbr.rel (0) target = $region5
    $region4: #{tpu_custom_call.1} parent=1 // pred_region
      _
    $region5: #{tpu_custom_call.1} parent=1 // pred_fallthru
      _
    // Predicated region
    $region6: #{tpu_custom_call.1} parent=1 // pred_check
      _
    $region7: #{tpu_custom_call.1} parent=1 // pred_check_branch
      %17 = sbr.rel (0) target = $region9
    $region8: #{tpu_custom_call.1} parent=1 // pred_region
      %19 = vsyncadd [#allocation4], 0
      %s21 = sshll.u32 %s1, 4
      %s22 = int_to_ptr.hbm [resolvable:$true] %s21
      %s23 = sshll.u32 [#allocation3], 4
      %s24 = int_to_ptr.vmem [resolvable:$true] %s23
      %26 = dma.hbm_to_vmem [thread:$0]  %s22, 64, %s24, [#allocation4]
    $region9: #{tpu_custom_call.1} parent=1 // pred_fallthru
      _
    // Predicated region
    $region10: #{tpu_custom_call.1} parent=1 // pred_check
      _
    $region11: #{tpu_custom_call.1} parent=1 // pred_check_branch
      %28 = sbr.rel (0) target = $region13
    $region12: #{tpu_custom_call.1} parent=1 // pred_region
      _
    $region13: #{tpu_custom_call.1} parent=1 // pred_fallthru
      _
    // Predicated region
    $region14: #{tpu_custom_call.1} parent=1 // pred_check
      _
    $region15: #{tpu_custom_call.1} parent=1 // pred_check_branch
      %30 = sbr.rel (0) target = $region17
    $region16: #{tpu_custom_call.1} parent=1 // pred_region
      _
    $region17: #{tpu_custom_call.1} parent=1 // pred_fallthru
      _
    // Predicated region
    $region18: #{tpu_custom_call.1} parent=1 // pred_check
      _
    $region19: #{tpu_custom_call.1} parent=1 // pred_check_branch
      %32 = sbr.rel (0) target = $region21
    $region20: #{tpu_custom_call.1} parent=1 // pred_region
      _
    $region21: #{tpu_custom_call.1} parent=1 // pred_fallthru
      _
    // Predicated region
    $region22: #{tpu_custom_call.1} parent=1 // pred_check
      _
    $region23: #{tpu_custom_call.1} parent=1 // pred_check_branch
      %34 = sbr.rel (0) target = $region25
    $region24: #{tpu_custom_call.1} parent=1 // pred_region
      %36 = dma.done [#allocation4], 64
    $region25: #{tpu_custom_call.1} parent=1 // pred_fallthru
      _
    %v37 = vld [vmem:[%s0] sm:$0xf]
    %v38 = vld [vmem:[#allocation3] sm:$0xf]
    %v39 = vmul.f32 %v37, %v38
    %v40 = vld [vmem:[%s2] sm:$0x7]
    %v41 = vld [vmem:[%s3] sm:$0x7]
    %43 = vset.pattern.permute.xlu0 0
    %44 = vperm.xlu0 %43, %v41
    %v45 = vpop.permute.xlu0 %44
    %v47 = vmul.f32 %v40, %v45
    %vm48 = vcmask 1043456
    %v49 = vsel %vm48, %v39, 0.0
    %v50 = vrot.slane %v49, 4
    %v51 = vadd.f32 %v49, %v50
    %v52 = vrot.slane %v51, 2
    %v53 = vadd.f32 %v51, %v52
    %v54 = vrot.slane %v53, 1
    %v55 = vadd.f32 %v53, %v54
    %vm56 = vcmask 1042432
    %v57 = vsel %vm56, %v47, 0.0
    %v58 = vrot.slane %v57, 4
    %v59 = vadd.f32 %v57, %v58
    %v60 = vrot.slane %v59, 2
    %v61 = vadd.f32 %v59, %v60
    %v62 = vrot.slane %v61, 1
    %v63 = vadd.f32 %v61, %v62
    %v64 = vadd.f32 %v55, %v63
    %v65 = vld [vmem:[#allocation2] sm:$0x1]
    %67 = vset.pattern.permute.xlu0 0
    %68 = vperm.xlu0 %67, %v65
    %v69 = vpop.permute.xlu0 %68
    %v71 = vperm.slane %v69, 0
    %v72 = vadd.f32 %v64, %v71
    %73 = vst [vmem:[#allocation6] sm:$0x1] %v72
    // Predicated region
    $region26: #{tpu_custom_call.1} parent=1 // pred_check
      _
    $region27: #{tpu_custom_call.1} parent=1 // pred_check_branch
      %75 = sbr.rel (0) target = $region29
    $region28: #{tpu_custom_call.1} parent=1 // pred_region
      %77 = vsyncadd [#allocation5], 0
      %s79 = sshll.u32 [#allocation6], 4
      %s80 = int_to_ptr.vmem [resolvable:$true] %s79
      %s81 = sshll.u32 %s5, 4
      %s82 = int_to_ptr.hbm [resolvable:$true] %s81
      %84 = dma.vmem_to_hbm [thread:$0]  %s80, 16, %s82, [#allocation5]
    $region29: #{tpu_custom_call.1} parent=1 // pred_fallthru
      _
    // Predicated region
    $region30: #{tpu_custom_call.1} parent=1 // pred_check
      _
    $region31: #{tpu_custom_call.1} parent=1 // pred_check_branch
      %86 = sbr.rel (0) target = $region33
    $region32: #{tpu_custom_call.1} parent=1 // pred_region
      %88 = dma.done [#allocation5], 16
    $region33: #{tpu_custom_call.1} parent=1 // pred_fallthru
      _
    %89 = vsyncpa [#allocation4], 1
    %90 = vsyncpa [#allocation5], 1

</llo_original>
